<compile_context>
chip_gen: v5e
topology: v5e:2x2
jax: 0.10.0
libtpu: 0.0.40
codegen_flags: <defaults>
</compile_context>

<pallas_src>
import functools

import jax
import jax.numpy as jnp
from jax.experimental import pallas as pl
from jax.experimental.pallas import tpu as pltpu


def _center_loss_kernel(x_ref, c_ref, out_ref, acc_ref, *, eps, max_val):
    # x_ref, c_ref: (TB, D) feature rows and their pre-gathered class centers.
    # out_ref:      (1, 1, 1) per-core partial sum, written once at the last inner step.
    # acc_ref:      (TB, 1) f32 scratch; per-row clamped distances summed across the
    #               inner (reduction) grid axis, scalar-reduced only in the finalize.
    i = pl.program_id(1)

    @pl.when(i == 0)
    def _init():
        acc_ref[...] = jnp.zeros_like(acc_ref)

    x = x_ref[...].astype(jnp.float32)
    c = c_ref[...].astype(jnp.float32)
    diff = x - c
    d = jnp.sum(diff * diff, axis=-1, keepdims=True)          # (TB, 1)
    acc_ref[...] += jnp.clip(d, eps, max_val)

    @pl.when(i == pl.num_programs(1) - 1)
    def _finalize():
        out_ref[...] = jnp.broadcast_to(jnp.sum(acc_ref[...]), out_ref.shape)


def center_loss(x, labels, centers, *, tile_rows=512, num_cores=2):
    """x: (B, D) float, labels: (B,) int, centers: (C, D) float -> scalar f32 loss."""
    B, D = x.shape
    C, Dc = centers.shape
    assert D == Dc
    eps, max_val = 1e-12, 1e12

    # Wrapper-side gather of the one needed center row per sample (clipped indices).
    gathered = jnp.take(centers, labels.astype(jnp.int32), axis=0, mode="clip")

    # Tile sizing: multiples of 8 rows; cap so 2 inputs x 2 pipeline buffers fit in
    # ~24 MiB of VMEM (safe on v7x's 64 MiB physical / 32 MiB scoped default).
    vmem_cap_rows = max(8, ((24 * 1024 * 1024) // (16 * D)) // 8 * 8)
    tb_limit = max(8, min(tile_rows, vmem_cap_rows))

    rows_per_core = -(-B // num_cores)            # ceil(B / num_cores)
    rows_per_core = -(-rows_per_core // 8) * 8    # sublane-align
    tb = min(tb_limit, rows_per_core)
    num_inner = -(-rows_per_core // tb)
    rows_per_core = num_inner * tb
    b_pad = num_cores * rows_per_core
    num_pad = b_pad - B

    if num_pad:
        x = jnp.pad(x, ((0, num_pad), (0, 0)))
        gathered = jnp.pad(gathered, ((0, num_pad), (0, 0)))

    kernel = functools.partial(_center_loss_kernel, eps=eps, max_val=max_val)

    grid_spec = pltpu.PrefetchScalarGridSpec(
        num_scalar_prefetch=0,
        grid=(num_cores, num_inner),
        in_specs=[
            pl.BlockSpec((tb, D), lambda p, i: (p * num_inner + i, 0)),
            pl.BlockSpec((tb, D), lambda p, i: (p * num_inner + i, 0)),
        ],
        out_specs=pl.BlockSpec((1, 1, 1), lambda p, i: (p, 0, 0)),
        scratch_shapes=[pltpu.VMEM((tb, 1), jnp.float32)],
    )

    partials = pl.pallas_call(
        kernel,
        out_shape=jax.ShapeDtypeStruct((num_cores, 1, 1), jnp.float32),
        grid_spec=grid_spec,
        compiler_params=pltpu.CompilerParams(
            dimension_semantics=("parallel", "arbitrary")),
    )(x, gathered)

    # Masked-out (exactly zero) distmat entries clamp up to eps in the reference,
    # contributing B*(C-1)*eps; zero-padded rows contributed num_pad*eps that must
    # be removed again.
    correction = (B * (C - 1) - num_pad) * eps
    return (jnp.sum(partials) + jnp.float32(correction)) / jnp.float32(B)


def center_loss_reference(x, labels, centers):
    """Pure-JAX reference mirroring the PyTorch forward exactly."""
    B = x.shape[0]
    C = centers.shape[0]
    x = x.astype(jnp.float32)
    c = centers.astype(jnp.float32)
    distmat = (
        jnp.sum(x * x, axis=1, keepdims=True)
        + jnp.sum(c * c, axis=1, keepdims=True).T
        - 2.0 * (x @ c.T)
    )
    mask = (labels[:, None] == jnp.arange(C)[None, :]).astype(jnp.float32)
    dist = jnp.clip(distmat * mask, 1e-12, 1e12)
    return jnp.sum(dist) / B


if __name__ == "__main__":
    # Module defaults: num_classes=10, feat_dim=768; small batch for the test.
    num_classes, feat_dim, batch = 10, 768, 32

    key = jax.random.PRNGKey(0)
    k_centers, k_x, k_labels = jax.random.split(key, 3)

    centers = jax.random.normal(k_centers, (num_classes, feat_dim), dtype=jnp.float32)
    x = jax.random.normal(k_x, (batch, feat_dim), dtype=jnp.float32)
    labels = jax.random.randint(k_labels, (batch,), 0, num_classes, dtype=jnp.int32)

    loss = jax.block_until_ready(center_loss(x, labels, centers))
    ref = jax.block_until_ready(center_loss_reference(x, labels, centers))

    assert jnp.allclose(loss, ref, rtol=1e-5, atol=1e-6), (loss, ref)
    print("KERNEL_OK")
</pallas_src>

<mosaic_0001>
module attributes {stable_mosaic.version = 11 : i64} {
  func.func @_center_loss_kernel(%arg0: i32, %arg1: i32, %arg2: memref<16x768xf32, #tpu.memory_space<vmem>>, %arg3: memref<16x768xf32, #tpu.memory_space<vmem>>, %arg4: memref<1x1x1xf32, #tpu.memory_space<vmem>>, %arg5: memref<16x1xf32, #tpu.memory_space<vmem>>) attributes {dimension_semantics = [#tpu.dimension_semantics<parallel>, #tpu.dimension_semantics<arbitrary>], iteration_bounds = array<i64: 2, 1>, scalar_prefetch = 0 : i64, scratch_operands = 1 : i64, tpu.core_type = #tpu.core_type<tc>, window_params = [{transform_indices = @transform_0, window_bounds = array<i64: 16, 768>}, {transform_indices = @transform_1, window_bounds = array<i64: 16, 768>}, {transform_indices = @transform_2, window_bounds = array<i64: 1, 1, 1>}]} {
    %c0_i32 = arith.constant 0 : i32
    %0 = arith.cmpi eq, %arg1, %c0_i32 : i32
    %1 = arith.extui %0 : i1 to i32
    %c0_i32_0 = arith.constant 0 : i32
    %2 = arith.cmpi ne, %1, %c0_i32_0 : i32
    scf.if %2 {
      %cst_12 = arith.constant 0.000000e+00 : f32
      %19 = vector.broadcast %cst_12 : f32 to vector<16x1xf32>
      %c0_13 = arith.constant 0 : index
      %c0_14 = arith.constant 0 : index
      %20 = vector.load %arg5[%c0_13, %c0_14] : memref<16x1xf32, #tpu.memory_space<vmem>>, vector<16x1xf32>
      tpu.vector_store %arg5[%c0_13, %c0_14], %19 {strides = array<i32>} : memref<16x1xf32, #tpu.memory_space<vmem>>, vector<16x1xf32>,
    } else {
    }
    %c0 = arith.constant 0 : index
    %c0_1 = arith.constant 0 : index
    %3 = vector.load %arg2[%c0, %c0_1] : memref<16x768xf32, #tpu.memory_space<vmem>>, vector<16x768xf32>
    %c0_2 = arith.constant 0 : index
    %c0_3 = arith.constant 0 : index
    %4 = vector.load %arg3[%c0_2, %c0_3] : memref<16x768xf32, #tpu.memory_space<vmem>>, vector<16x768xf32>
    %5 = arith.subf %3, %4 : vector<16x768xf32>
    %6 = arith.mulf %5, %5 : vector<16x768xf32>
    %cst = arith.constant dense<0.000000e+00> : vector<16xf32>
    %7 = vector.multi_reduction <add>, %6, %cst [1] : vector<16x768xf32> to vector<16xf32>
    %8 = vector.shape_cast %7 : vector<16xf32> to vector<16x1xf32>
    %c0_4 = arith.constant 0 : index
    %c0_5 = arith.constant 0 : index
    %9 = vector.load %arg5[%c0_4, %c0_5] : memref<16x1xf32, #tpu.memory_space<vmem>>, vector<16x1xf32>
    %cst_6 = arith.constant 9.99999996E-13 : f32
    %cst_7 = arith.constant 9.99999995E+11 : f32
    %10 = vector.broadcast %cst_6 : f32 to vector<16x1xf32>
    %11 = arith.maximumf %10, %8 : vector<16x1xf32>
    %12 = vector.broadcast %cst_7 : f32 to vector<16x1xf32>
    %13 = arith.minimumf %12, %11 : vector<16x1xf32>
    %14 = arith.addf %9, %13 : vector<16x1xf32>
    %c0_8 = arith.constant 0 : index
    %c0_9 = arith.constant 0 : index
    %15 = vector.load %arg5[%c0_8, %c0_9] : memref<16x1xf32, #tpu.memory_space<vmem>>, vector<16x1xf32>
    tpu.vector_store %arg5[%c0_8, %c0_9], %14 {strides = array<i32>} : memref<16x1xf32, #tpu.memory_space<vmem>>, vector<16x1xf32>,
    %c0_i32_10 = arith.constant 0 : i32
    %16 = arith.cmpi eq, %arg1, %c0_i32_10 : i32
    %17 = arith.extui %16 : i1 to i32
    %c0_i32_11 = arith.constant 0 : i32
    %18 = arith.cmpi ne, %17, %c0_i32_11 : i32
    scf.if %18 {
      %c0_12 = arith.constant 0 : index
      %c0_13 = arith.constant 0 : index
      %19 = vector.load %arg5[%c0_12, %c0_13] : memref<16x1xf32, #tpu.memory_space<vmem>>, vector<16x1xf32>
      %20 = vector.shape_cast %19 : vector<16x1xf32> to vector<1x16x1xf32>
      %cst_14 = arith.constant dense<0.000000e+00> : vector<1xf32>
      %21 = vector.multi_reduction <add>, %20, %cst_14 [1, 2] : vector<1x16x1xf32> to vector<1xf32>
      %22 = vector.shape_cast %21 : vector<1xf32> to vector<1x1x1xf32>
      %23 = vector.extract %22[0, 0, 0] : f32 from vector<1x1x1xf32>
      %24 = vector.broadcast %23 : f32 to vector<1x1x1xf32>
      %c0_15 = arith.constant 0 : index
      %c0_16 = arith.constant 0 : index
      %c0_17 = arith.constant 0 : index
      %25 = vector.load %arg4[%c0_15, %c0_16, %c0_17] : memref<1x1x1xf32, #tpu.memory_space<vmem>>, vector<1x1x1xf32>
      tpu.vector_store %arg4[%c0_15, %c0_16, %c0_17], %24 {strides = array<i32>} : memref<1x1x1xf32, #tpu.memory_space<vmem>>, vector<1x1x1xf32>,
    } else {
    }
    return
  }
  func.func @transform_0(%arg0: i32, %arg1: i32) -> (i32, i32) {
    %c1_i32 = arith.constant 1 : i32
    %0 = arith.muli %arg0, %c1_i32 : i32
    %1 = arith.addi %0, %arg1 : i32
    %c0_i32 = arith.constant 0 : i32
    %c0_i32_0 = arith.constant 0 : i32
    return %1, %c0_i32 : i32, i32
  }
  func.func @transform_1(%arg0: i32, %arg1: i32) -> (i32, i32) {
    %c1_i32 = arith.constant 1 : i32
    %0 = arith.muli %arg0, %c1_i32 : i32
    %1 = arith.addi %0, %arg1 : i32
    %c0_i32 = arith.constant 0 : i32
    %c0_i32_0 = arith.constant 0 : i32
    return %1, %c0_i32 : i32, i32
  }
  func.func @transform_2(%arg0: i32, %arg1: i32) -> (i32, i32, i32) {
    %c0_i32 = arith.constant 0 : i32
    %c0_i32_0 = arith.constant 0 : i32
    %c0_i32_1 = arith.constant 0 : i32
    return %arg0, %c0_i32, %c0_i32_0 : i32, i32, i32
  }
}

</mosaic_0001>

<llo_original>
// kernel: tpu_custom_call.1
$region0: #{tpu_custom_call.1}
  #allocation0 [shape = 'u32[]', space=smem, size = 0x4, offset = 0x4, fixed_abs, tag = 'smem constant byte address 0x4 - core index']
  #allocation1 [shape = 'u32[72,128]{1,0:T(1,128)}', space=vmem, size = 0x9000, scoped, tag = 'internal scratch']
  #allocation2 [shape = 'f32[16,1]{1,0:T(8,128)}', space=vmem, size = 0x2000, scoped, tag = 'scratch operand']
  %s0 = inlined_call_operand.hbm [shape: f32[32,768], index: 0, kind: input, shape index: {}]
  %s1 = inlined_call_operand.hbm [shape: f32[32,768], index: 1, kind: input, shape index: {}]
  %s2 = inlined_call_operand.vmem [shape: f32[2,1,1], index: 2, kind: output, shape index: {}]
  %s3 = sld [smem:[#allocation0]]
  $region57: #{tpu_custom_call.1} parent=0
    _
  %s5 = ssub.s32 1, %s3
  %s6 = scalar_select 0, %s5, %s3
  $region1: #{tpu_custom_call.1} parent=0
    #allocation3 [shape = 'u8[98304]{0}', space=vmem, size = 0x18000, scoped, tag = 'input window, operand 0']
    #allocation4 [shape = 's32[2]{0}', space=sflag, size = 0x8, scoped, tag = 'scoped memory for tpu_custom_call.1']
    #allocation5 [shape = 'u8[98304]{0}', space=vmem, size = 0x18000, scoped, tag = 'input window, operand 1']
    #allocation6 [shape = 's32[2]{0}', space=sflag, size = 0x8, scoped, tag = 'scoped memory for tpu_custom_call.1']
    %7 = vsyncpa [#allocation4], 0
    %s8 = scalar_lea.sflag [#allocation4], 1
    %9 = vsyncpa %s8, 0
    %10 = vsyncpa [#allocation6], 0
    %s11 = scalar_lea.sflag [#allocation6], 1
    %12 = vsyncpa %s11, 0
    loop: start=0, step=1, limit=4
    $region2: #{tpu_custom_call.1} parent=1 // loop_pre_header
      _
    $region3: #{tpu_custom_call.1} parent=1 // loop_header
      %s14 = sphi 0, %s18
      %p15 = scmp.ge.s32.totalorder %s14, 4
      %s21 = sphi 0, %s33
      %s22 = sphi 0, %s29
      %s23 = sphi 0, %s21
      %s24 = sphi 0, %s22
      %s25 = sphi 0, %s23
      %s26 = sphi 0, %s24
      %s38 = sphi 0, %s40
      %s41 = sphi 0, %s38
      %s42 = sphi 0, %s41
      %s58 = sphi 0, %s42
      %s66 = sphi 0, %s68
      %s69 = sphi 0, %s66
      %s70 = sphi 0, %s69
      %s86 = sphi 0, %s70
      %s92 = sphi 0, %s94
      %s95 = sphi 0, %s92
      %s96 = sphi 0, %s95
      %s112 = sphi 0, %s96
    $region4: #{tpu_custom_call.1} parent=1 // loop_header_branch
      %17 = sbr.rel (%p15) target = $region8
    $region5: #{tpu_custom_call.1} parent=1 // loop_body
      %s19 = ssub.s32 %s14, 1
      %s20 = ssub.s32 %s14, 2
      %s27 = sadd.s32 1, %s22
      %p28 = scmp.ge.s32.totalorder %s27, 1
      %s29 = scalar_select %p28, 0, %s27
      %s30 = sadd.s32 1, %s21
      %s31 = scalar_select %p28, %s30, %s21
      %p32 = scmp.ge.s32.totalorder %s31, 2
      %s33 = scalar_select %p32, 0, %s31
      %s34 = sadd.s32 %s21, %s22
      %s35 = sadd.s32 %s33, %s29
      %s36 = ssub.s32 %s34, %s35
      %p37 = scmp.eq.s32.totalorder %s36, 0
      %s39 = sadd.s32 %s38, 1
      %s40 = scalar_select %p37, %s38, %s39
      %p43 = pneg %p37
      %p44 = scmp.eq.s32.totalorder %s14, 1
      %p45 = por %p43, %p44
      %p46 = scmp.ne.s32.totalorder %s38, %s41
      %p47 = scmp.eq.s32.totalorder %s14, 0
      %p48 = por %p46, %p47
      %p49 = scmp.ne.s32.totalorder %s38, %s41
      %p50 = scmp.eq.s32.totalorder %s19, 1
      %p51 = por %p49, %p50
      %p52 = scmp.ne.s32.totalorder %s41, %s42
      %p53 = scmp.eq.s32.totalorder %s19, 0
      %p54 = por %p52, %p53
      %p55 = scmp.ne.s32.totalorder %s41, %s42
      %p56 = scmp.eq.s32.totalorder %s20, 1
      %p57 = por %p55, %p56
      %p59 = scmp.ne.s32.totalorder %s42, %s58
      %p60 = scmp.eq.s32.totalorder %s20, 0
      %p61 = por %p59, %p60
      %s62 = sadd.s32 %s21, %s22
      %s63 = sadd.s32 %s33, %s29
      %s64 = ssub.s32 %s62, %s63
      %p65 = scmp.eq.s32.totalorder %s64, 0
      %s67 = sadd.s32 %s66, 1
      %s68 = scalar_select %p65, %s66, %s67
      %p71 = pneg %p65
      %p72 = scmp.eq.s32.totalorder %s14, 1
      %p73 = por %p71, %p72
      %p74 = scmp.ne.s32.totalorder %s66, %s69
      %p75 = scmp.eq.s32.totalorder %s14, 0
      %p76 = por %p74, %p75
      %p77 = scmp.ne.s32.totalorder %s66, %s69
      %p78 = scmp.eq.s32.totalorder %s19, 1
      %p79 = por %p77, %p78
      %p80 = scmp.ne.s32.totalorder %s69, %s70
      %p81 = scmp.eq.s32.totalorder %s19, 0
      %p82 = por %p80, %p81
      %p83 = scmp.ne.s32.totalorder %s69, %s70
      %p84 = scmp.eq.s32.totalorder %s20, 1
      %p85 = por %p83, %p84
      %p87 = scmp.ne.s32.totalorder %s70, %s86
      %p88 = scmp.eq.s32.totalorder %s20, 0
      %p89 = por %p87, %p88
      %s90 = ssub.s32 %s21, %s33
      %p91 = scmp.eq.s32.totalorder %s90, 0
      %s93 = sadd.s32 %s92, 1
      %s94 = scalar_select %p91, %s92, %s93
      %p97 = pneg %p91
      %p98 = scmp.eq.s32.totalorder %s14, 1
      %p99 = por %p97, %p98
      %p100 = scmp.ne.s32.totalorder %s92, %s95
      %p101 = scmp.eq.s32.totalorder %s14, 0
      %p102 = por %p100, %p101
      %p103 = scmp.ne.s32.totalorder %s92, %s95
      %p104 = scmp.eq.s32.totalorder %s19, 1
      %p105 = por %p103, %p104
      %p106 = scmp.ne.s32.totalorder %s95, %s96
      %p107 = scmp.eq.s32.totalorder %s19, 0
      %p108 = por %p106, %p107
      %p109 = scmp.ne.s32.totalorder %s95, %s96
      %p110 = scmp.eq.s32.totalorder %s20, 1
      %p111 = por %p109, %p110
      %p113 = scmp.ne.s32.totalorder %s96, %s112
      %p114 = scmp.eq.s32.totalorder %s20, 0
      %p115 = por %p113, %p114
      %p116 = scmp.le.s32.totalorder 1, %s14
      %p117 = scmp.lt.s32.totalorder %s14, 3
      %p118 = pnand %p116, %p117
      %p119 = pneg %p118
      // Predicated region
      $region9: #{tpu_custom_call.1} parent=5 // pred_check
        _
      $region10: #{tpu_custom_call.1} parent=5 // pred_check_branch
        %121 = sbr.rel (%p118) target = $region12
      $region11: #{tpu_custom_call.1} parent=5 // pred_region
        %s122 = ssub.s32 %s14, 1
      $region12: #{tpu_custom_call.1} parent=5 // pred_fallthru
        _
      %p123 = scmp.lt.s32.totalorder %s14, 2
      // Predicated region
      $region13: #{tpu_custom_call.1} parent=5 // pred_check
        %p124 = pneg %p123
      $region14: #{tpu_custom_call.1} parent=5 // pred_check_branch
        %126 = sbr.rel (%p124) target = $region16
      $region15: #{tpu_custom_call.1} parent=5 // pred_region
        // Predicated region
        $region17: #{tpu_custom_call.1} parent=15 // pred_check
          %p127 = pneg %p48
        $region18: #{tpu_custom_call.1} parent=15 // pred_check_branch
          %129 = sbr.rel (%p127) target = $region20
        $region19: #{tpu_custom_call.1} parent=15 // pred_region
          %s130 = sand.u32 %s38, 1
          %s131 = scalar_lea.sflag [#allocation4], %s130
          %s132 = sand.u32 %s38, 1
          %s133 = smul.addr %s132, 96
          %s134 = scalar_lea.vmem [#allocation3], %s133
          %s135 = sadd.s32 %s21, %s22
          %s136 = smul.u32 2, %s135
          %138 = vsyncadd %s131, 0
          %s139 = smul.addr %s136, 6
          %s140 = smul.addr %s139, 8
          %s141 = scalar_lea.hbm %s0, %s140
          %s142 = sshll.u32 %s141, 4
          %s143 = int_to_ptr.hbm [resolvable:$true] %s142
          %s144 = sshll.u32 %s134, 4
          %s145 = int_to_ptr.vmem [resolvable:$true] %s144
          %150 = dma.hbm_to_vmem [thread:$0]  %s143, 1536, %s145, %s131, 768, 768, 48
        $region20: #{tpu_custom_call.1} parent=15 // pred_fallthru
          _
        // Predicated region
        $region21: #{tpu_custom_call.1} parent=15 // pred_check
          %p151 = pneg %p76
        $region22: #{tpu_custom_call.1} parent=15 // pred_check_branch
          %153 = sbr.rel (%p151) target = $region24
        $region23: #{tpu_custom_call.1} parent=15 // pred_region
          %s154 = sand.u32 %s66, 1
          %s155 = scalar_lea.sflag [#allocation6], %s154
          %s156 = sand.u32 %s66, 1
          %s157 = smul.addr %s156, 96
          %s158 = scalar_lea.vmem [#allocation5], %s157
          %s159 = sadd.s32 %s21, %s22
          %s160 = smul.u32 2, %s159
          %162 = vsyncadd %s155, 0
          %s163 = smul.addr %s160, 6
          %s164 = smul.addr %s163, 8
          %s165 = scalar_lea.hbm %s1, %s164
          %s166 = sshll.u32 %s165, 4
          %s167 = int_to_ptr.hbm [resolvable:$true] %s166
          %s168 = sshll.u32 %s158, 4
          %s169 = int_to_ptr.vmem [resolvable:$true] %s168
          %174 = dma.hbm_to_vmem [thread:$0]  %s167, 1536, %s169, %s155, 768, 768, 48
        $region24: #{tpu_custom_call.1} parent=15 // pred_fallthru
          _
      $region16: #{tpu_custom_call.1} parent=5 // pred_fallthru
        _
      %p175 = scmp.le.s32.totalorder 1, %s14
      %p176 = scmp.lt.s32.totalorder %s14, 3
      %p177 = pnand %p175, %p176
      %p178 = pneg %p177
      // Predicated region
      $region25: #{tpu_custom_call.1} parent=5 // pred_check
        _
      $region26: #{tpu_custom_call.1} parent=5 // pred_check_branch
        %180 = sbr.rel (%p177) target = $region28
      $region27: #{tpu_custom_call.1} parent=5 // pred_region
        %s181 = ssub.s32 %s14, 1
        %s182 = sand.u32 %s41, 1
        %s183 = scalar_lea.sflag [#allocation4], %s182
        %s184 = sand.u32 %s41, 1
        %s185 = smul.addr %s184, 96
        %s186 = scalar_lea.vmem [#allocation3], %s185
        // Predicated region
        $region29: #{tpu_custom_call.1} parent=27 // pred_check
          %p187 = pneg %p54
        $region30: #{tpu_custom_call.1} parent=27 // pred_check_branch
          %189 = sbr.rel (%p187) target = $region32
        $region31: #{tpu_custom_call.1} parent=27 // pred_region
          %191 = dma.done %s183, 1536
        $region32: #{tpu_custom_call.1} parent=27 // pred_fallthru
          _
        %s192 = sand.u32 %s69, 1
        %s193 = scalar_lea.sflag [#allocation6], %s192
        %s194 = sand.u32 %s69, 1
        %s195 = smul.addr %s194, 96
        %s196 = scalar_lea.vmem [#allocation5], %s195
        // Predicated region
        $region33: #{tpu_custom_call.1} parent=27 // pred_check
          %p197 = pneg %p82
        $region34: #{tpu_custom_call.1} parent=27 // pred_check_branch
          %199 = sbr.rel (%p197) target = $region36
        $region35: #{tpu_custom_call.1} parent=27 // pred_region
          %201 = dma.done %s193, 1536
        $region36: #{tpu_custom_call.1} parent=27 // pred_fallthru
          _
        %s202 = sand.u32 %s41, 1
        %s203 = scalar_lea.sflag [#allocation4], %s202
        %s204 = sand.u32 %s41, 1
        %s205 = smul.addr %s204, 96
        %s206 = scalar_lea.vmem [#allocation3], %s205
        %p207 = pneg %p54
        %p208 = pneg %p51
        %s209 = sand.u32 %s69, 1
        %s210 = scalar_lea.sflag [#allocation6], %s209
        %s211 = sand.u32 %s69, 1
        %s212 = smul.addr %s211, 96
        %s213 = scalar_lea.vmem [#allocation5], %s212
        %p214 = pneg %p82
        %p215 = pneg %p79
        %p216 = pneg %p108
        %p217 = pneg %p105
        %p218 = scmp.lt.s32.totalorder %s23, 1
        %s219 = scalar_select %p218, %s23, 1
        %s220 = scalar_lea.vmem %s2, %s219
        %s221 = sadd.s32 %s23, %s24
        %s222 = smul.u32 2, %s221
        %s223 = sadd.s32 %s23, %s24
        %s224 = smul.u32 2, %s223
        %p225 = scmp.lt.s32.totalorder %s23, 1
        %s226 = scalar_select %p225, %s23, 1
        %s227 = scalar_lea.vmem %s2, %s226
        %p228 = scmp.eq.s32.totalorder %s24, 0
        // Predicated region
        $region37: #{tpu_custom_call.1} parent=27 // pred_check
          %p229 = pneg %p228
        $region38: #{tpu_custom_call.1} parent=27 // pred_check_branch
          %231 = sbr.rel (%p229) target = $region40
        $region39: #{tpu_custom_call.1} parent=27 // pred_region
          %vm232 = vcmask 7168
          %233 = vst.msk [vmem:[#allocation2] sm:$0xff] %vm232, 0.0
          %234 = vst.msk [vmem:[#allocation2 + $0x8] sm:$0xff] %vm232, 0.0
        $region40: #{tpu_custom_call.1} parent=27 // pred_fallthru
          _
        %v235 = vld [vmem:[%s186] sm:$0xff]
        %v236 = vld [vmem:[%s186 + $0x8] sm:$0xff]
        %v237 = vld [vmem:[%s186 + $0x10] sm:$0xff]
        %v238 = vld [vmem:[%s186 + $0x18] sm:$0xff]
        %v239 = vld [vmem:[%s186 + $0x20] sm:$0xff]
        %v240 = vld [vmem:[%s186 + $0x28] sm:$0xff]
        %v241 = vld [vmem:[%s186 + $0x30] sm:$0xff]
        %v242 = vld [vmem:[%s186 + $0x38] sm:$0xff]
        %v243 = vld [vmem:[%s186 + $0x40] sm:$0xff]
        %v244 = vld [vmem:[%s186 + $0x48] sm:$0xff]
        %v245 = vld [vmem:[%s186 + $0x50] sm:$0xff]
        %v246 = vld [vmem:[%s186 + $0x58] sm:$0xff]
        %v247 = vld [vmem:[%s196] sm:$0xff]
        %v248 = vld [vmem:[%s196 + $0x8] sm:$0xff]
        %v249 = vld [vmem:[%s196 + $0x10] sm:$0xff]
        %v250 = vld [vmem:[%s196 + $0x18] sm:$0xff]
        %v251 = vld [vmem:[%s196 + $0x20] sm:$0xff]
        %v252 = vld [vmem:[%s196 + $0x28] sm:$0xff]
        %v253 = vld [vmem:[%s196 + $0x30] sm:$0xff]
        %v254 = vld [vmem:[%s196 + $0x38] sm:$0xff]
        %v255 = vld [vmem:[%s196 + $0x40] sm:$0xff]
        %v256 = vld [vmem:[%s196 + $0x48] sm:$0xff]
        %v257 = vld [vmem:[%s196 + $0x50] sm:$0xff]
        %v258 = vld [vmem:[%s196 + $0x58] sm:$0xff]
        %v259 = vsub.f32 %v235, %v247
        %v260 = vsub.f32 %v236, %v248
        %v261 = vsub.f32 %v237, %v249
        %v262 = vsub.f32 %v238, %v250
        %v263 = vsub.f32 %v239, %v251
        %v264 = vsub.f32 %v240, %v252
        %v265 = vsub.f32 %v241, %v253
        %v266 = vsub.f32 %v242, %v254
        %v267 = vsub.f32 %v243, %v255
        %v268 = vsub.f32 %v244, %v256
        %v269 = vsub.f32 %v245, %v257
        %v270 = vsub.f32 %v246, %v258
        %v271 = vmul.f32 %v259, %v259
        %v272 = vmul.f32 %v260, %v260
        %v273 = vmul.f32 %v261, %v261
        %v274 = vmul.f32 %v262, %v262
        %v275 = vmul.f32 %v263, %v263
        %v276 = vmul.f32 %v264, %v264
        %v277 = vmul.f32 %v265, %v265
        %v278 = vmul.f32 %v266, %v266
        %v279 = vmul.f32 %v267, %v267
        %v280 = vmul.f32 %v268, %v268
        %v281 = vmul.f32 %v269, %v269
        %v282 = vmul.f32 %v270, %v270
        %v283 = vadd.f32 %v271, %v272
        %v284 = vadd.f32 %v283, %v273
        %v285 = vadd.f32 %v284, %v274
        %v286 = vadd.f32 %v285, %v275
        %v287 = vadd.f32 %v286, %v276
        %288 = vadd.xlane.f32.xlu0 %v287
        %v289 = vpop.xlane.xlu0 %288
        %v290 = vadd.f32 %v277, %v278
        %v291 = vadd.f32 %v290, %v279
        %v292 = vadd.f32 %v291, %v280
        %v293 = vadd.f32 %v292, %v281
        %v294 = vadd.f32 %v293, %v282
        %295 = vadd.xlane.f32.xlu0 %v294
        %v296 = vpop.xlane.xlu0 %295
        %v297 = vld [vmem:[#allocation2] sm:$0xff]
        %v298 = vld [vmem:[#allocation2 + $0x8] sm:$0xff]
        %v299 = vmax.f32 %v289, 1e-12
        %v300 = vmax.f32 %v296, 1e-12
        %v301 = vmin.f32 %v299, 1e+12
        %v302 = vmin.f32 %v300, 1e+12
        %v303 = vadd.f32 %v297, %v301
        %v304 = vadd.f32 %v298, %v302
        %vm305 = vcmask 7168
        %306 = vst.msk [vmem:[#allocation2] sm:$0xff] %vm305, %v303
        %307 = vst.msk [vmem:[#allocation2 + $0x8] sm:$0xff] %vm305, %v304
        // Predicated region
        $region41: #{tpu_custom_call.1} parent=27 // pred_check
          %p308 = pneg %p228
        $region42: #{tpu_custom_call.1} parent=27 // pred_check_branch
          %310 = sbr.rel (%p308) target = $region44
        $region43: #{tpu_custom_call.1} parent=27 // pred_region
          %v311 = vld [vmem:[#allocation2] sm:$0xff]
          %v312 = vld [vmem:[#allocation2 + $0x8] sm:$0xff]
          %v313 = vsel %vm305, %v311, 0.0
          %v314 = vsel %vm305, %v312, 0.0
          %v315 = vadd.f32 %v313, %v314
          %316 = vadd.xlane.f32.xlu0 %v315
          %v317 = vpop.xlane.xlu0 %316
          %v318 = vrot.slane %v317, 4
          %v319 = vadd.f32 %v317, %v318
          %v320 = vrot.slane %v319, 2
          %v321 = vadd.f32 %v319, %v320
          %v322 = vrot.slane %v321, 1
          %v323 = vadd.f32 %v321, %v322
          %s324 = vtos %v323
          %v325 = vstv %s324
          %vm326 = vcmask 0
          %327 = vst.msk [vmem:[%s227] sm:$0x1] %vm326, %v325
        $region44: #{tpu_custom_call.1} parent=27 // pred_fallthru
          _
        %p328 = scmp.lt.s32.totalorder %s23, 1
        %s329 = scalar_select %p328, %s23, 1
        %s330 = scalar_lea.vmem %s2, %s329
        // Predicated region
        $region45: #{tpu_custom_call.1} parent=27 // pred_check
          %p331 = pneg %p105
        $region46: #{tpu_custom_call.1} parent=27 // pred_check_branch
          %333 = sbr.rel (%p331) target = $region48
        $region47: #{tpu_custom_call.1} parent=27 // pred_region
          _
        $region48: #{tpu_custom_call.1} parent=27 // pred_fallthru
          _
      $region28: #{tpu_custom_call.1} parent=5 // pred_fallthru
        _
      %p334 = scmp.le.s32.totalorder 2, %s14
      // Predicated region
      $region49: #{tpu_custom_call.1} parent=5 // pred_check
        %p335 = pneg %p334
      $region50: #{tpu_custom_call.1} parent=5 // pred_check_branch
        %337 = sbr.rel (%p335) target = $region52
      $region51: #{tpu_custom_call.1} parent=5 // pred_region
        %s338 = ssub.s32 %s14, 2
        // Predicated region
        $region53: #{tpu_custom_call.1} parent=51 // pred_check
          %p339 = pneg %p111
        $region54: #{tpu_custom_call.1} parent=51 // pred_check_branch
          %341 = sbr.rel (%p339) target = $region56
        $region55: #{tpu_custom_call.1} parent=51 // pred_region
          %p342 = scmp.lt.s32.totalorder %s25, 1
          %s343 = scalar_select %p342, %s25, 1
          %s344 = scalar_lea.vmem %s2, %s343
        $region56: #{tpu_custom_call.1} parent=51 // pred_fallthru
          _
      $region52: #{tpu_custom_call.1} parent=5 // pred_fallthru
        _
    $region6: #{tpu_custom_call.1} parent=1 // loop_footer
      %s18 = sadd.s32 1, %s14
    $region7: #{tpu_custom_call.1} parent=1 // loop_footer_branch
      %13 = sbr.rel target = $region3
    $region8: #{tpu_custom_call.1} parent=1 // loop_exit
      _
    %345 = vsyncpa [#allocation4], 1
    %s346 = scalar_lea.sflag [#allocation4], 1
    %347 = vsyncpa %s346, 1
    %348 = vsyncpa [#allocation6], 1
    %s349 = scalar_lea.sflag [#allocation6], 1
    %350 = vsyncpa %s349, 1

</llo_original>
